<compile_context>
chip_gen: v5e
topology: v5e:2x2
jax: 0.10.0
libtpu: 0.0.40
codegen_flags: <defaults>
</compile_context>

<pallas_src>
import functools

import jax
import jax.numpy as jnp
from jax.experimental import pallas as pl
from jax.experimental.pallas import tpu as pltpu


def _channel_attention_kernel(x_ref, w1t_ref, w2t_ref, o_ref,
                              sum_sc, max_sc, stage_sc,
                              *, hw, thw, tb):
    # x_ref   : (TB, C, THW) tile of the input (spatial flattened on lanes)
    # w1t_ref : (C, Cr)  = w1.T   (first 1x1 conv weight, pre-transposed)
    # w2t_ref : (Cr, C)  = w2.T   (second 1x1 conv weight, pre-transposed)
    # o_ref   : (TB, C)  sigmoid(MLP(avg) + MLP(max))
    # sum_sc, max_sc : (TB, C) f32 running accumulators across the HW axis
    # stage_sc       : (2*TB, C) f32 staging block for the fused MLP
    k = pl.program_id(1)
    nk = pl.num_programs(1)

    @pl.when(k == 0)
    def _init():
        sum_sc[...] = jnp.zeros_like(sum_sc)
        max_sc[...] = jnp.full_like(max_sc, -jnp.inf)

    x = x_ref[...]  # native dtype; no full f32 copy of the tile

    if hw % thw != 0:
        # Remainder tile along HW: out-of-bounds lanes are undefined, mask them
        # out of both the sum (-> 0) and the max (-> -inf).
        lane = jax.lax.broadcasted_iota(jnp.int32, x.shape, dimension=2) + k * thw
        valid = lane < hw
        x_sum = jnp.where(valid, x, jnp.zeros((), x.dtype))
        x_max = jnp.where(valid, x, jnp.full((), -jnp.inf, x.dtype))
    else:
        x_sum = x
        x_max = x

    sum_sc[...] += jnp.sum(x_sum, axis=-1, dtype=jnp.float32)
    max_sc[...] = jnp.maximum(max_sc[...], jnp.max(x_max, axis=-1).astype(jnp.float32))

    @pl.when(k == nk - 1)
    def _finalize():
        # Stage avg (= sum / HW) and max into one (2*TB, C) block so the shared
        # MLP runs as a single pair of matmuls instead of two.
        stage_sc[pl.ds(0, tb), :] = sum_sc[...] * jnp.float32(1.0 / hw)
        stage_sc[pl.ds(tb, tb), :] = max_sc[...]
        v = stage_sc[...]                                        # (2*TB, C)

        h = jnp.dot(v, w1t_ref[...].astype(jnp.float32),
                    preferred_element_type=jnp.float32)          # (2*TB, Cr)
        h = jnp.maximum(h, 0.0)                                  # ReLU
        y = jnp.dot(h, w2t_ref[...].astype(jnp.float32),
                    preferred_element_type=jnp.float32)          # (2*TB, C)

        out = y[:tb] + y[tb:]                                    # avg-path + max-path
        o_ref[...] = jax.nn.sigmoid(out).astype(o_ref.dtype)


def channel_attention(x, w1, w2, *, tb=None, thw=None):
    """CBAM channel attention.

    x : (B, C, H, W)  NCHW feature map.
    w1: (Cr, C)       first 1x1 conv weight (PyTorch layout, 1x1 dims squeezed).
    w2: (C, Cr)       second 1x1 conv weight.
    Returns the (B, C, 1, 1) attention map in x's dtype.
    """
    B, C, H, W = x.shape
    Cr = w1.shape[0]
    HW = H * W
    itemsize = jnp.dtype(x.dtype).itemsize

    # --- tile sizes --------------------------------------------------------
    # Output block is (TB, C): TB must be a multiple of 8 or the full batch.
    if tb is None:
        tb = 8 if (B % 8 == 0) else B
    # x tile is (TB, C, THW). Keep each buffer <= ~4 MiB so the double-buffered
    # pipeline fits scoped VMEM on every generation (v5e 16 MiB default,
    # v7x 64 MiB total) while staying wide enough (>=128 lanes) for good DMA.
    if thw is None:
        budget = 4 * 1024 * 1024
        max_thw = max(128, budget // max(1, tb * C * itemsize))
        thw = HW if HW <= max_thw else (max_thw // 128) * 128
    thw = min(thw, HW)

    grid = (pl.cdiv(B, tb), pl.cdiv(HW, thw))
    x_flat = x.reshape(B, C, HW)

    kernel = functools.partial(_channel_attention_kernel, hw=HW, thw=thw, tb=tb)

    cost = pl.CostEstimate(
        flops=2 * B * C * HW + 4 * (2 * B) * C * Cr,
        transcendentals=B * C,
        bytes_accessed=(B * C * HW + B * C) * itemsize + 2 * C * Cr * 4,
    )

    out = pl.pallas_call(
        kernel,
        out_shape=jax.ShapeDtypeStruct((B, C), x.dtype),
        grid_spec=pltpu.PrefetchScalarGridSpec(
            num_scalar_prefetch=0,
            grid=grid,
            in_specs=[
                pl.BlockSpec((tb, C, thw), lambda b, k: (b, 0, k)),
                pl.BlockSpec((C, Cr), lambda b, k: (0, 0)),
                pl.BlockSpec((Cr, C), lambda b, k: (0, 0)),
            ],
            # Output block index is independent of k -> stays resident across
            # the HW reduction; written only on the last k step.
            out_specs=pl.BlockSpec((tb, C), lambda b, k: (b, 0)),
            scratch_shapes=[
                pltpu.VMEM((tb, C), jnp.float32),       # running sum
                pltpu.VMEM((tb, C), jnp.float32),       # running max
                pltpu.VMEM((2 * tb, C), jnp.float32),   # fused-MLP staging
            ],
        ),
        compiler_params=pltpu.CompilerParams(
            dimension_semantics=("parallel", "arbitrary"),
            vmem_limit_bytes=32 * 1024 * 1024,
        ),
        cost_estimate=cost,
    )(x_flat, jnp.transpose(w1), jnp.transpose(w2))

    return out.reshape(B, C, 1, 1)


def reference(x, w1, w2):
    # Pure-JAX reference for sanity checking.
    xf = x.astype(jnp.float32)
    avg = jnp.mean(xf, axis=(2, 3))  # (B, C)
    mx = jnp.max(xf, axis=(2, 3))    # (B, C)

    def mlp(v):
        h = jnp.maximum(v @ w1.astype(jnp.float32).T, 0.0)
        return h @ w2.astype(jnp.float32).T

    return jax.nn.sigmoid(mlp(avg) + mlp(mx)).reshape(*avg.shape, 1, 1)


if __name__ == "__main__":
    key = jax.random.PRNGKey(0)
    kx, k1, k2, kx2 = jax.random.split(key, 4)

    # CBAM1-like config (channel=64, ratio=16) at a small spatial size.
    B, C, H, W = 2, 64, 16, 16
    ratio = 16
    Cr = C // ratio

    x = jax.random.normal(kx, (B, C, H, W), dtype=jnp.float32)
    w1 = jax.random.normal(k1, (Cr, C), dtype=jnp.float32) * 0.1
    w2 = jax.random.normal(k2, (C, Cr), dtype=jnp.float32) * 0.1

    # Case 1: HW = 256, forced THW=128 -> exercises the 2-step HW reduction.
    out = jax.block_until_ready(channel_attention(x, w1, w2, thw=128))
    ref = reference(x, w1, w2)
    assert out.shape == (B, C, 1, 1), out.shape
    assert jnp.allclose(out, ref, atol=1e-5, rtol=1e-5), "case 1 mismatch vs reference"

    # Case 2: HW = 240 (not a multiple of 128) -> exercises the remainder-tile mask.
    H2, W2 = 12, 20
    x2 = jax.random.normal(kx2, (B, C, H2, W2), dtype=jnp.float32)
    out2 = jax.block_until_ready(channel_attention(x2, w1, w2, thw=128))
    ref2 = reference(x2, w1, w2)
    assert out2.shape == (B, C, 1, 1), out2.shape
    assert jnp.allclose(out2, ref2, atol=1e-5, rtol=1e-5), "case 2 mismatch vs reference"

    print("KERNEL_OK")
</pallas_src>

<mosaic_0001>
module attributes {stable_mosaic.version = 11 : i64} {
  func.func @_channel_attention_kernel(%arg0: i32, %arg1: i32, %arg2: memref<2x64x128xf32, #tpu.memory_space<vmem>>, %arg3: memref<64x4xf32, #tpu.memory_space<vmem>>, %arg4: memref<4x64xf32, #tpu.memory_space<vmem>>, %arg5: memref<2x64xf32, #tpu.memory_space<vmem>>, %arg6: memref<2x64xf32, #tpu.memory_space<vmem>>, %arg7: memref<2x64xf32, #tpu.memory_space<vmem>>, %arg8: memref<4x64xf32, #tpu.memory_space<vmem>>) attributes {dimension_semantics = [#tpu.dimension_semantics<parallel>, #tpu.dimension_semantics<arbitrary>], iteration_bounds = array<i64: 1, 2>, scalar_prefetch = 0 : i64, scratch_operands = 3 : i64, tpu.core_type = #tpu.core_type<tc>, window_params = [{transform_indices = @transform_0, window_bounds = array<i64: 2, 64, 128>}, {pipeline_mode = #tpu.pipeline_mode<synchronous>, transform_indices = @transform_1, window_bounds = array<i64: 64, 4>}, {pipeline_mode = #tpu.pipeline_mode<synchronous>, transform_indices = @transform_2, window_bounds = array<i64: 4, 64>}, {transform_indices = @transform_3, window_bounds = array<i64: 2, 64>}]} {
    %c0_i32 = arith.constant 0 : i32
    %0 = arith.cmpi eq, %arg1, %c0_i32 : i32
    %1 = arith.extui %0 : i1 to i32
    %c0_i32_0 = arith.constant 0 : i32
    %2 = arith.cmpi ne, %1, %c0_i32_0 : i32
    scf.if %2 {
      %cst_13 = arith.constant 0.000000e+00 : f32
      %15 = vector.broadcast %cst_13 : f32 to vector<2x64xf32>
      %c0_14 = arith.constant 0 : index
      %c0_15 = arith.constant 0 : index
      %16 = vector.load %arg6[%c0_14, %c0_15] : memref<2x64xf32, #tpu.memory_space<vmem>>, vector<2x64xf32>
      tpu.vector_store %arg6[%c0_14, %c0_15], %15 {strides = array<i32>} : memref<2x64xf32, #tpu.memory_space<vmem>>, vector<2x64xf32>,
      %cst_16 = arith.constant 0xFF800000 : f32
      %17 = vector.broadcast %cst_16 : f32 to vector<2x64xf32>
      %c0_17 = arith.constant 0 : index
      %c0_18 = arith.constant 0 : index
      %18 = vector.load %arg7[%c0_17, %c0_18] : memref<2x64xf32, #tpu.memory_space<vmem>>, vector<2x64xf32>
      tpu.vector_store %arg7[%c0_17, %c0_18], %17 {strides = array<i32>} : memref<2x64xf32, #tpu.memory_space<vmem>>, vector<2x64xf32>,
    } else {
    }
    %c0 = arith.constant 0 : index
    %c0_1 = arith.constant 0 : index
    %c0_2 = arith.constant 0 : index
    %3 = vector.load %arg2[%c0, %c0_1, %c0_2] : memref<2x64x128xf32, #tpu.memory_space<vmem>>, vector<2x64x128xf32>
    %c0_3 = arith.constant 0 : index
    %c0_4 = arith.constant 0 : index
    %4 = vector.load %arg6[%c0_3, %c0_4] : memref<2x64xf32, #tpu.memory_space<vmem>>, vector<2x64xf32>
    %cst = arith.constant dense<0.000000e+00> : vector<2x64xf32>
    %5 = vector.multi_reduction <add>, %3, %cst [2] : vector<2x64x128xf32> to vector<2x64xf32>
    %6 = arith.addf %4, %5 : vector<2x64xf32>
    %c0_5 = arith.constant 0 : index
    %c0_6 = arith.constant 0 : index
    %7 = vector.load %arg6[%c0_5, %c0_6] : memref<2x64xf32, #tpu.memory_space<vmem>>, vector<2x64xf32>
    tpu.vector_store %arg6[%c0_5, %c0_6], %6 {strides = array<i32>} : memref<2x64xf32, #tpu.memory_space<vmem>>, vector<2x64xf32>,
    %c0_7 = arith.constant 0 : index
    %c0_8 = arith.constant 0 : index
    %8 = vector.load %arg7[%c0_7, %c0_8] : memref<2x64xf32, #tpu.memory_space<vmem>>, vector<2x64xf32>
    %cst_9 = arith.constant dense<0xFF800000> : vector<2x64xf32>
    %9 = vector.multi_reduction <maximumf>, %3, %cst_9 [2] : vector<2x64x128xf32> to vector<2x64xf32>
    %10 = arith.maximumf %8, %9 : vector<2x64xf32>
    %c0_10 = arith.constant 0 : index
    %c0_11 = arith.constant 0 : index
    %11 = vector.load %arg7[%c0_10, %c0_11] : memref<2x64xf32, #tpu.memory_space<vmem>>, vector<2x64xf32>
    tpu.vector_store %arg7[%c0_10, %c0_11], %10 {strides = array<i32>} : memref<2x64xf32, #tpu.memory_space<vmem>>, vector<2x64xf32>,
    %c1_i32 = arith.constant 1 : i32
    %12 = arith.cmpi eq, %arg1, %c1_i32 : i32
    %13 = arith.extui %12 : i1 to i32
    %c0_i32_12 = arith.constant 0 : i32
    %14 = arith.cmpi ne, %13, %c0_i32_12 : i32
    scf.if %14 {
      %c0_13 = arith.constant 0 : index
      %c0_14 = arith.constant 0 : index
      %15 = vector.load %arg6[%c0_13, %c0_14] : memref<2x64xf32, #tpu.memory_space<vmem>>, vector<2x64xf32>
      %cst_15 = arith.constant 3.906250e-03 : f32
      %16 = vector.broadcast %cst_15 : f32 to vector<2x64xf32>
      %17 = arith.mulf %15, %16 : vector<2x64xf32>
      %c0_16 = arith.constant 0 : index
      %c0_17 = arith.constant 0 : index
      %18 = vector.load %arg8[%c0_16, %c0_17] : memref<4x64xf32, #tpu.memory_space<vmem>>, vector<2x64xf32>
      tpu.vector_store %arg8[%c0_16, %c0_17], %17 {strides = array<i32>} : memref<4x64xf32, #tpu.memory_space<vmem>>, vector<2x64xf32>,
      %c0_18 = arith.constant 0 : index
      %c0_19 = arith.constant 0 : index
      %19 = vector.load %arg7[%c0_18, %c0_19] : memref<2x64xf32, #tpu.memory_space<vmem>>, vector<2x64xf32>
      %c2 = arith.constant 2 : index
      %c0_20 = arith.constant 0 : index
      %20 = vector.load %arg8[%c2, %c0_20] : memref<4x64xf32, #tpu.memory_space<vmem>>, vector<2x64xf32>
      tpu.vector_store %arg8[%c2, %c0_20], %19 {strides = array<i32>} : memref<4x64xf32, #tpu.memory_space<vmem>>, vector<2x64xf32>,
      %c0_21 = arith.constant 0 : index
      %c0_22 = arith.constant 0 : index
      %21 = vector.load %arg8[%c0_21, %c0_22] : memref<4x64xf32, #tpu.memory_space<vmem>>, vector<4x64xf32>
      %c0_23 = arith.constant 0 : index
      %c0_24 = arith.constant 0 : index
      %22 = vector.load %arg3[%c0_23, %c0_24] : memref<64x4xf32, #tpu.memory_space<vmem>>, vector<64x4xf32>
      %cst_25 = arith.constant dense<0.000000e+00> : vector<4x4xf32>
      %23 = tpu.matmul %21, %22, %cst_25 {dimension_numbers = #tpu.dot_dimension_numbers<[1], [0], [0], [1], [0, 0, 1, 1], [], []>} : vector<4x64xf32>, vector<64x4xf32>, vector<4x4xf32> -> vector<4x4xf32>
      %cst_26 = arith.constant 0.000000e+00 : f32
      %24 = vector.broadcast %cst_26 : f32 to vector<4x4xf32>
      %25 = arith.maximumf %23, %24 : vector<4x4xf32>
      %c0_27 = arith.constant 0 : index
      %c0_28 = arith.constant 0 : index
      %26 = vector.load %arg4[%c0_27, %c0_28] : memref<4x64xf32, #tpu.memory_space<vmem>>, vector<4x64xf32>
      %cst_29 = arith.constant dense<0.000000e+00> : vector<4x64xf32>
      %27 = tpu.matmul %25, %26, %cst_29 {dimension_numbers = #tpu.dot_dimension_numbers<[1], [0], [0], [1], [0, 0, 1, 1], [], []>} : vector<4x4xf32>, vector<4x64xf32>, vector<4x64xf32> -> vector<4x64xf32>
      %28 = vector.extract_strided_slice %27 {offsets = [0, 0], sizes = [2, 64], strides = [1, 1]} : vector<4x64xf32> to vector<2x64xf32>
      %29 = vector.extract_strided_slice %27 {offsets = [2, 0], sizes = [2, 64], strides = [1, 1]} : vector<4x64xf32> to vector<2x64xf32>
      %30 = arith.addf %28, %29 : vector<2x64xf32>
      %31 = arith.negf %30 : vector<2x64xf32>
      %32 = math.exp %31 : vector<2x64xf32>
      %cst_30 = arith.constant 1.000000e+00 : f32
      %33 = vector.broadcast %cst_30 : f32 to vector<2x64xf32>
      %34 = arith.addf %33, %32 : vector<2x64xf32>
      %35 = arith.divf %33, %34 : vector<2x64xf32>
      %c0_31 = arith.constant 0 : index
      %c0_32 = arith.constant 0 : index
      %36 = vector.load %arg5[%c0_31, %c0_32] : memref<2x64xf32, #tpu.memory_space<vmem>>, vector<2x64xf32>
      tpu.vector_store %arg5[%c0_31, %c0_32], %35 {strides = array<i32>} : memref<2x64xf32, #tpu.memory_space<vmem>>, vector<2x64xf32>,
    } else {
    }
    return
  }
  func.func @transform_0(%arg0: i32, %arg1: i32) -> (i32, i32, i32) {
    %c0_i32 = arith.constant 0 : i32
    %c0_i32_0 = arith.constant 0 : i32
    return %arg0, %c0_i32, %arg1 : i32, i32, i32
  }
  func.func @transform_1(%arg0: i32, %arg1: i32) -> (i32, i32) {
    %c0_i32 = arith.constant 0 : i32
    %c0_i32_0 = arith.constant 0 : i32
    %c0_i32_1 = arith.constant 0 : i32
    return %c0_i32, %c0_i32_0 : i32, i32
  }
  func.func @transform_2(%arg0: i32, %arg1: i32) -> (i32, i32) {
    %c0_i32 = arith.constant 0 : i32
    %c0_i32_0 = arith.constant 0 : i32
    %c0_i32_1 = arith.constant 0 : i32
    return %c0_i32, %c0_i32_0 : i32, i32
  }
  func.func @transform_3(%arg0: i32, %arg1: i32) -> (i32, i32) {
    %c0_i32 = arith.constant 0 : i32
    %c0_i32_0 = arith.constant 0 : i32
    return %arg0, %c0_i32 : i32, i32
  }
}

</mosaic_0001>

<llo_original>
// kernel: tpu_custom_call.1
$region0: #{tpu_custom_call.1}
  #allocation0 [shape = 'u32[]', space=smem, size = 0x4, offset = 0x4, fixed_abs, tag = 'smem constant byte address 0x4 - core index']
  #allocation1 [shape = 'u32[72,128]{1,0:T(1,128)}', space=vmem, size = 0x9000, scoped, tag = 'internal scratch']
  #allocation2 [shape = 'f32[2,64]{1,0:T(2,128)}', space=vmem, size = 0x400, scoped, tag = 'scratch operand']
  #allocation3 [shape = 'f32[2,64]{1,0:T(2,128)}', space=vmem, size = 0x400, scoped, tag = 'scratch operand']
  #allocation4 [shape = 'f32[4,64]{1,0:T(4,128)}', space=vmem, size = 0x800, scoped, tag = 'scratch operand']
  %s0 = inlined_call_operand.hbm [shape: f32[2,64,256], index: 0, kind: input, shape index: {}]
  %s1 = inlined_call_operand.vmem [shape: f32[64,4], index: 1, kind: input, shape index: {}]
  %s2 = inlined_call_operand.vmem [shape: f32[4,64], index: 2, kind: input, shape index: {}]
  %s3 = inlined_call_operand.hbm [shape: f32[2,64], index: 3, kind: output, shape index: {}]
  %s4 = sld [smem:[#allocation0]]
  $region57: #{tpu_custom_call.1} parent=0
    _
  %s6 = ssub.s32 1, %s4
  %s7 = scalar_select 0, %s6, %s4
  $region1: #{tpu_custom_call.1} parent=0
    #allocation5 [shape = 'u8[131072]{0}', space=vmem, size = 0x20000, scoped, tag = 'input window, operand 0']
    #allocation6 [shape = 's32[2]{0}', space=sflag, size = 0x8, scoped, tag = 'scoped memory for tpu_custom_call.1']
    #allocation7 [shape = 's32[2]{0}', space=sflag, size = 0x8, scoped, tag = 'scoped memory for tpu_custom_call.1']
    #allocation8 [shape = 'u8[1024]{0}', space=vmem, size = 0x400, scoped, tag = 'output window, operand 0, single buffered']
    %8 = vsyncpa [#allocation6], 0
    %s9 = scalar_lea.sflag [#allocation6], 1
    %10 = vsyncpa %s9, 0
    %11 = vsyncpa [#allocation7], 0
    loop: start=0, step=1, limit=4
    $region2: #{tpu_custom_call.1} parent=1 // loop_pre_header
      _
    $region3: #{tpu_custom_call.1} parent=1 // loop_header
      %s13 = sphi 0, %s17
      %p14 = scmp.ge.s32.totalorder %s13, 4
      %s20 = sphi 0, %s32
      %s21 = sphi 0, %s28
      %s22 = sphi 0, %s20
      %s23 = sphi 0, %s21
      %s24 = sphi 0, %s22
      %s25 = sphi 0, %s23
      %s37 = sphi 0, %s39
      %s40 = sphi 0, %s37
      %s41 = sphi 0, %s40
      %s57 = sphi 0, %s41
      %s61 = sphi 0, %s61
      %s63 = sphi 0, %s61
      %s64 = sphi 0, %s63
      %s78 = sphi 0, %s64
      %s82 = sphi 0, %s82
      %s84 = sphi 0, %s82
      %s85 = sphi 0, %s84
      %s99 = sphi 0, %s85
      %s105 = sphi 0, %s107
      %s108 = sphi 0, %s105
      %s109 = sphi 0, %s108
      %s125 = sphi 0, %s109
    $region4: #{tpu_custom_call.1} parent=1 // loop_header_branch
      %16 = sbr.rel (%p14) target = $region8
    $region5: #{tpu_custom_call.1} parent=1 // loop_body
      %s18 = ssub.s32 %s13, 1
      %s19 = ssub.s32 %s13, 2
      %s26 = sadd.s32 1, %s21
      %p27 = scmp.ge.s32.totalorder %s26, 2
      %s28 = scalar_select %p27, 0, %s26
      %s29 = sadd.s32 1, %s20
      %s30 = scalar_select %p27, %s29, %s20
      %p31 = scmp.ge.s32.totalorder %s30, 1
      %s32 = scalar_select %p31, 0, %s30
      %s33 = ssub.s32 %s20, %s32
      %s34 = ssub.s32 %s21, %s28
      %s35 = sor.u32 %s33, %s34
      %p36 = scmp.eq.s32.totalorder %s35, 0
      %s38 = sadd.s32 %s37, 1
      %s39 = scalar_select %p36, %s37, %s38
      %p42 = pneg %p36
      %p43 = scmp.eq.s32.totalorder %s13, 1
      %p44 = por %p42, %p43
      %p45 = scmp.ne.s32.totalorder %s37, %s40
      %p46 = scmp.eq.s32.totalorder %s13, 0
      %p47 = por %p45, %p46
      %p48 = scmp.ne.s32.totalorder %s37, %s40
      %p49 = scmp.eq.s32.totalorder %s18, 1
      %p50 = por %p48, %p49
      %p51 = scmp.ne.s32.totalorder %s40, %s41
      %p52 = scmp.eq.s32.totalorder %s18, 0
      %p53 = por %p51, %p52
      %p54 = scmp.ne.s32.totalorder %s40, %s41
      %p55 = scmp.eq.s32.totalorder %s19, 1
      %p56 = por %p54, %p55
      %p58 = scmp.ne.s32.totalorder %s41, %s57
      %p59 = scmp.eq.s32.totalorder %s19, 0
      %p60 = por %p58, %p59
      %s62 = sadd.s32 %s61, 1
      %p65 = scmp.eq.s32.totalorder %s13, 1
      %p66 = scmp.ne.s32.totalorder %s61, %s63
      %p67 = scmp.eq.s32.totalorder %s13, 0
      %p68 = por %p66, %p67
      %p69 = scmp.ne.s32.totalorder %s61, %s63
      %p70 = scmp.eq.s32.totalorder %s18, 1
      %p71 = por %p69, %p70
      %p72 = scmp.ne.s32.totalorder %s63, %s64
      %p73 = scmp.eq.s32.totalorder %s18, 0
      %p74 = por %p72, %p73
      %p75 = scmp.ne.s32.totalorder %s63, %s64
      %p76 = scmp.eq.s32.totalorder %s19, 1
      %p77 = por %p75, %p76
      %p79 = scmp.ne.s32.totalorder %s64, %s78
      %p80 = scmp.eq.s32.totalorder %s19, 0
      %p81 = por %p79, %p80
      %s83 = sadd.s32 %s82, 1
      %p86 = scmp.eq.s32.totalorder %s13, 1
      %p87 = scmp.ne.s32.totalorder %s82, %s84
      %p88 = scmp.eq.s32.totalorder %s13, 0
      %p89 = por %p87, %p88
      %p90 = scmp.ne.s32.totalorder %s82, %s84
      %p91 = scmp.eq.s32.totalorder %s18, 1
      %p92 = por %p90, %p91
      %p93 = scmp.ne.s32.totalorder %s84, %s85
      %p94 = scmp.eq.s32.totalorder %s18, 0
      %p95 = por %p93, %p94
      %p96 = scmp.ne.s32.totalorder %s84, %s85
      %p97 = scmp.eq.s32.totalorder %s19, 1
      %p98 = por %p96, %p97
      %p100 = scmp.ne.s32.totalorder %s85, %s99
      %p101 = scmp.eq.s32.totalorder %s19, 0
      %p102 = por %p100, %p101
      %s103 = ssub.s32 %s20, %s32
      %p104 = scmp.eq.s32.totalorder %s103, 0
      %s106 = sadd.s32 %s105, 1
      %s107 = scalar_select %p104, %s105, %s106
      %p110 = pneg %p104
      %p111 = scmp.eq.s32.totalorder %s13, 1
      %p112 = por %p110, %p111
      %p113 = scmp.ne.s32.totalorder %s105, %s108
      %p114 = scmp.eq.s32.totalorder %s13, 0
      %p115 = por %p113, %p114
      %p116 = scmp.ne.s32.totalorder %s105, %s108
      %p117 = scmp.eq.s32.totalorder %s18, 1
      %p118 = por %p116, %p117
      %p119 = scmp.ne.s32.totalorder %s108, %s109
      %p120 = scmp.eq.s32.totalorder %s18, 0
      %p121 = por %p119, %p120
      %p122 = scmp.ne.s32.totalorder %s108, %s109
      %p123 = scmp.eq.s32.totalorder %s19, 1
      %p124 = por %p122, %p123
      %p126 = scmp.ne.s32.totalorder %s109, %s125
      %p127 = scmp.eq.s32.totalorder %s19, 0
      %p128 = por %p126, %p127
      %p129 = scmp.le.s32.totalorder 1, %s13
      %p130 = scmp.lt.s32.totalorder %s13, 3
      %p131 = pnand %p129, %p130
      %p132 = pneg %p131
      // Predicated region
      $region9: #{tpu_custom_call.1} parent=5 // pred_check
        _
      $region10: #{tpu_custom_call.1} parent=5 // pred_check_branch
        %134 = sbr.rel (%p131) target = $region12
      $region11: #{tpu_custom_call.1} parent=5 // pred_region
        %s135 = ssub.s32 %s13, 1
        // Predicated region
        $region13: #{tpu_custom_call.1} parent=11 // pred_check
          %p136 = pneg %p74
        $region14: #{tpu_custom_call.1} parent=11 // pred_check_branch
          %138 = sbr.rel (%p136) target = $region16
        $region15: #{tpu_custom_call.1} parent=11 // pred_region
          _
        $region16: #{tpu_custom_call.1} parent=11 // pred_fallthru
          _
        // Predicated region
        $region17: #{tpu_custom_call.1} parent=11 // pred_check
          %p139 = pneg %p95
        $region18: #{tpu_custom_call.1} parent=11 // pred_check_branch
          %141 = sbr.rel (%p139) target = $region20
        $region19: #{tpu_custom_call.1} parent=11 // pred_region
          _
        $region20: #{tpu_custom_call.1} parent=11 // pred_fallthru
          _
      $region12: #{tpu_custom_call.1} parent=5 // pred_fallthru
        _
      %p142 = scmp.lt.s32.totalorder %s13, 2
      // Predicated region
      $region21: #{tpu_custom_call.1} parent=5 // pred_check
        %p143 = pneg %p142
      $region22: #{tpu_custom_call.1} parent=5 // pred_check_branch
        %145 = sbr.rel (%p143) target = $region24
      $region23: #{tpu_custom_call.1} parent=5 // pred_region
        // Predicated region
        $region25: #{tpu_custom_call.1} parent=23 // pred_check
          %p146 = pneg %p47
        $region26: #{tpu_custom_call.1} parent=23 // pred_check_branch
          %148 = sbr.rel (%p146) target = $region28
        $region27: #{tpu_custom_call.1} parent=23 // pred_region
          %s149 = sand.u32 %s37, 1
          %s150 = scalar_lea.sflag [#allocation6], %s149
          %s151 = sand.u32 %s37, 1
          %s152 = smul.addr %s151, 128
          %s153 = scalar_lea.vmem [#allocation5], %s152
          %s154 = smul.u32 2, %s20
          %156 = vsyncadd %s150, 0
          %s157 = smul.addr %s154, 16
          %s158 = sadd.s32 %s21, %s157
          %s159 = smul.addr %s158, 8
          %s160 = scalar_lea.hbm %s0, %s159
          %s161 = sshll.u32 %s160, 4
          %s162 = int_to_ptr.hbm [resolvable:$true] %s161
          %s163 = sshll.u32 %s153, 4
          %s164 = int_to_ptr.vmem [resolvable:$true] %s163
          %169 = dma.hbm_to_vmem [thread:$0]  %s162, 2048, %s164, %s150, 256, 128, 8
        $region28: #{tpu_custom_call.1} parent=23 // pred_fallthru
          _
      $region24: #{tpu_custom_call.1} parent=5 // pred_fallthru
        _
      %p170 = scmp.le.s32.totalorder 1, %s13
      %p171 = scmp.lt.s32.totalorder %s13, 3
      %p172 = pnand %p170, %p171
      %p173 = pneg %p172
      // Predicated region
      $region29: #{tpu_custom_call.1} parent=5 // pred_check
        _
      $region30: #{tpu_custom_call.1} parent=5 // pred_check_branch
        %175 = sbr.rel (%p172) target = $region32
      $region31: #{tpu_custom_call.1} parent=5 // pred_region
        %s176 = ssub.s32 %s13, 1
        %s177 = sand.u32 %s40, 1
        %s178 = scalar_lea.sflag [#allocation6], %s177
        %s179 = sand.u32 %s40, 1
        %s180 = smul.addr %s179, 128
        %s181 = scalar_lea.vmem [#allocation5], %s180
        // Predicated region
        $region33: #{tpu_custom_call.1} parent=31 // pred_check
          %p182 = pneg %p53
        $region34: #{tpu_custom_call.1} parent=31 // pred_check_branch
          %184 = sbr.rel (%p182) target = $region36
        $region35: #{tpu_custom_call.1} parent=31 // pred_region
          %186 = dma.done %s178, 2048
        $region36: #{tpu_custom_call.1} parent=31 // pred_fallthru
          _
        %s187 = sand.u32 %s40, 1
        %s188 = scalar_lea.sflag [#allocation6], %s187
        %s189 = sand.u32 %s40, 1
        %s190 = smul.addr %s189, 128
        %s191 = scalar_lea.vmem [#allocation5], %s190
        %p192 = pneg %p53
        %p193 = pneg %p50
        %p194 = pneg %p74
        %p195 = pneg %p71
        %p196 = pneg %p95
        %p197 = pneg %p92
        %p198 = pneg %p121
        %p199 = pneg %p118
        %s200 = smul.u32 2, %s22
        %p201 = scmp.eq.s32.totalorder %s23, 0
        // Predicated region
        $region37: #{tpu_custom_call.1} parent=31 // pred_check
          %p202 = pneg %p201
        $region38: #{tpu_custom_call.1} parent=31 // pred_check_branch
          %204 = sbr.rel (%p202) target = $region40
        $region39: #{tpu_custom_call.1} parent=31 // pred_region
          %vm205 = vcmask 517120
          %206 = vst.msk [vmem:[#allocation2] sm:$0x3] %vm205, 0.0
          %207 = vst.msk [vmem:[#allocation3] sm:$0x3] %vm205, -inf
        $region40: #{tpu_custom_call.1} parent=31 // pred_fallthru
          _
        %v208 = vld [vmem:[%s181] sm:$0xff]
        %v209 = vld [vmem:[%s181 + $0x8] sm:$0xff]
        %v210 = vld [vmem:[%s181 + $0x10] sm:$0xff]
        %v211 = vld [vmem:[%s181 + $0x18] sm:$0xff]
        %v212 = vld [vmem:[%s181 + $0x20] sm:$0xff]
        %v213 = vld [vmem:[%s181 + $0x28] sm:$0xff]
        %v214 = vld [vmem:[%s181 + $0x30] sm:$0xff]
        %v215 = vld [vmem:[%s181 + $0x38] sm:$0xff]
        %v216 = vld [vmem:[%s181 + $0x40] sm:$0xff]
        %v217 = vld [vmem:[%s181 + $0x48] sm:$0xff]
        %v218 = vld [vmem:[%s181 + $0x50] sm:$0xff]
        %v219 = vld [vmem:[%s181 + $0x58] sm:$0xff]
        %v220 = vld [vmem:[%s181 + $0x60] sm:$0xff]
        %v221 = vld [vmem:[%s181 + $0x68] sm:$0xff]
        %v222 = vld [vmem:[%s181 + $0x70] sm:$0xff]
        %v223 = vld [vmem:[%s181 + $0x78] sm:$0xff]
        %v224 = vld [vmem:[#allocation2] sm:$0x3]
        %225 = vadd.xlane.f32.xlu0 %v208
        %v226 = vpop.xlane.xlu0 %225
        %227 = vadd.xlane.f32.xlu0 %v209
        %v228 = vpop.xlane.xlu0 %227
        %229 = vadd.xlane.f32.xlu0 %v210
        %v230 = vpop.xlane.xlu0 %229
        %231 = vadd.xlane.f32.xlu0 %v211
        %v232 = vpop.xlane.xlu0 %231
        %233 = vadd.xlane.f32.xlu0 %v212
        %v234 = vpop.xlane.xlu0 %233
        %235 = vadd.xlane.f32.xlu0 %v213
        %v236 = vpop.xlane.xlu0 %235
        %237 = vadd.xlane.f32.xlu0 %v214
        %v238 = vpop.xlane.xlu0 %237
        %239 = vadd.xlane.f32.xlu0 %v215
        %v240 = vpop.xlane.xlu0 %239
        %241 = vadd.xlane.f32.xlu0 %v216
        %v242 = vpop.xlane.xlu0 %241
        %243 = vadd.xlane.f32.xlu0 %v217
        %v244 = vpop.xlane.xlu0 %243
        %245 = vadd.xlane.f32.xlu0 %v218
        %v246 = vpop.xlane.xlu0 %245
        %247 = vadd.xlane.f32.xlu0 %v219
        %v248 = vpop.xlane.xlu0 %247
        %249 = vadd.xlane.f32.xlu0 %v220
        %v250 = vpop.xlane.xlu0 %249
        %251 = vadd.xlane.f32.xlu0 %v221
        %v252 = vpop.xlane.xlu0 %251
        %253 = vadd.xlane.f32.xlu0 %v222
        %v254 = vpop.xlane.xlu0 %253
        %255 = vadd.xlane.f32.xlu0 %v223
        %v256 = vpop.xlane.xlu0 %255
        %v273 = vlaneseq
        %v274 = vand.u32 %v273, 127
        %v275 = vperm.slane %v226, %v274
        %v276 = vadd.s32 %v274, 4294967288
        %v277 = vperm.slane %v228, %v276
        %vm278 = vcmask 130112
        %v279 = vsel %vm278, %v277, %v275
        %v280 = vadd.s32 %v274, 4294967280
        %v281 = vperm.slane %v230, %v280
        %vm282 = vcmask 195712
        %v283 = vsel %vm282, %v281, %v279
        %v284 = vadd.s32 %v274, 4294967272
        %v285 = vperm.slane %v232, %v284
        %vm286 = vcmask 261312
        %v287 = vsel %vm286, %v285, %v283
        %v288 = vadd.s32 %v274, 4294967264
        %v289 = vperm.slane %v234, %v288
        %vm290 = vcmask 326912
        %v291 = vsel %vm290, %v289, %v287
        %v292 = vadd.s32 %v274, 4294967256
        %v293 = vperm.slane %v236, %v292
        %vm294 = vcmask 392512
        %v295 = vsel %vm294, %v293, %v291
        %v296 = vadd.s32 %v274, 4294967248
        %v297 = vperm.slane %v238, %v296
        %vm298 = vcmask 458112
        %v299 = vsel %vm298, %v297, %v295
        %v300 = vadd.s32 %v274, 4294967240
        %v301 = vperm.slane %v240, %v300
        %vm302 = vcmask 523712
        %v303 = vsel %vm302, %v301, %v299
        %v304 = vperm.slane %v242, %v274
        %v305 = vperm.slane %v244, %v276
        %v306 = vsel %vm278, %v305, %v304
        %v307 = vperm.slane %v246, %v280
        %v308 = vsel %vm282, %v307, %v306
        %v309 = vperm.slane %v248, %v284
        %v310 = vsel %vm286, %v309, %v308
        %v311 = vperm.slane %v250, %v288
        %v312 = vsel %vm290, %v311, %v310
        %v313 = vperm.slane %v252, %v292
        %v314 = vsel %vm294, %v313, %v312
        %v315 = vperm.slane %v254, %v296
        %v316 = vsel %vm298, %v315, %v314
        %v317 = vperm.slane %v256, %v300
        %v318 = vsel %vm302, %v317, %v316
        %vm319 = vcmask 1041409
        %v320 = vsel %vm319, %v318, %v303
        %v322 = vadd.f32 %v224, %v320
        %vm323 = vcmask 517120
        %324 = vst.msk [vmem:[#allocation2] sm:$0x3] %vm323, %v322
        %v325 = vld [vmem:[#allocation3] sm:$0x3]
        %326 = vmax.xlane.f32.xlu0 %v208
        %v327 = vpop.xlane.xlu0 %326
        %328 = vmax.xlane.f32.xlu0 %v209
        %v329 = vpop.xlane.xlu0 %328
        %330 = vmax.xlane.f32.xlu0 %v210
        %v331 = vpop.xlane.xlu0 %330
        %332 = vmax.xlane.f32.xlu0 %v211
        %v333 = vpop.xlane.xlu0 %332
        %334 = vmax.xlane.f32.xlu0 %v212
        %v335 = vpop.xlane.xlu0 %334
        %336 = vmax.xlane.f32.xlu0 %v213
        %v337 = vpop.xlane.xlu0 %336
        %338 = vmax.xlane.f32.xlu0 %v214
        %v339 = vpop.xlane.xlu0 %338
        %340 = vmax.xlane.f32.xlu0 %v215
        %v341 = vpop.xlane.xlu0 %340
        %342 = vmax.xlane.f32.xlu0 %v216
        %v343 = vpop.xlane.xlu0 %342
        %344 = vmax.xlane.f32.xlu0 %v217
        %v345 = vpop.xlane.xlu0 %344
        %346 = vmax.xlane.f32.xlu0 %v218
        %v347 = vpop.xlane.xlu0 %346
        %348 = vmax.xlane.f32.xlu0 %v219
        %v349 = vpop.xlane.xlu0 %348
        %350 = vmax.xlane.f32.xlu0 %v220
        %v351 = vpop.xlane.xlu0 %350
        %352 = vmax.xlane.f32.xlu0 %v221
        %v353 = vpop.xlane.xlu0 %352
        %354 = vmax.xlane.f32.xlu0 %v222
        %v355 = vpop.xlane.xlu0 %354
        %356 = vmax.xlane.f32.xlu0 %v223
        %v357 = vpop.xlane.xlu0 %356
        %v374 = vperm.slane %v327, %v274
        %v375 = vperm.slane %v329, %v276
        %v376 = vsel %vm278, %v375, %v374
        %v377 = vperm.slane %v331, %v280
        %v378 = vsel %vm282, %v377, %v376
        %v379 = vperm.slane %v333, %v284
        %v380 = vsel %vm286, %v379, %v378
        %v381 = vperm.slane %v335, %v288
        %v382 = vsel %vm290, %v381, %v380
        %v383 = vperm.slane %v337, %v292
        %v384 = vsel %vm294, %v383, %v382
        %v385 = vperm.slane %v339, %v296
        %v386 = vsel %vm298, %v385, %v384
        %v387 = vperm.slane %v341, %v300
        %v388 = vsel %vm302, %v387, %v386
        %v389 = vperm.slane %v343, %v274
        %v390 = vperm.slane %v345, %v276
        %v391 = vsel %vm278, %v390, %v389
        %v392 = vperm.slane %v347, %v280
        %v393 = vsel %vm282, %v392, %v391
        %v394 = vperm.slane %v349, %v284
        %v395 = vsel %vm286, %v394, %v393
        %v396 = vperm.slane %v351, %v288
        %v397 = vsel %vm290, %v396, %v395
        %v398 = vperm.slane %v353, %v292
        %v399 = vsel %vm294, %v398, %v397
        %v400 = vperm.slane %v355, %v296
        %v401 = vsel %vm298, %v400, %v399
        %v402 = vperm.slane %v357, %v300
        %v403 = vsel %vm302, %v402, %v401
        %v404 = vsel %vm319, %v403, %v388
        %v406 = vmax.f32 %v325, %v404
        %407 = vst.msk [vmem:[#allocation3] sm:$0x3] %vm323, %v406
        %p408 = scmp.eq.s32.totalorder %s23, 1
        // Predicated region
        $region41: #{tpu_custom_call.1} parent=31 // pred_check
          %p409 = pneg %p408
        $region42: #{tpu_custom_call.1} parent=31 // pred_check_branch
          %411 = sbr.rel (%p409) target = $region44
        $region43: #{tpu_custom_call.1} parent=31 // pred_region
          %v412 = vld [vmem:[#allocation2] sm:$0x3]
          %v413 = vmul.f32 %v412, 0.00390625
          %414 = vst.msk [vmem:[#allocation4] sm:$0x3] %vm323, %v413
          %v415 = vld [vmem:[#allocation3] sm:$0x3]
          %416 = vst.msk [vmem:[#allocation4 + $0x2] sm:$0x3] %vm323, %v415
          %v417 = vld [vmem:[#allocation4] sm:$0xf]
          %v418 = vld [vmem:[%s1] sm:$0xff]
          %v419 = vld [vmem:[%s1 + $0x8] sm:$0xff]
          %v420 = vld [vmem:[%s1 + $0x10] sm:$0xff]
          %v421 = vld [vmem:[%s1 + $0x18] sm:$0xff]
          %v422 = vld [vmem:[%s1 + $0x20] sm:$0xff]
          %v423 = vld [vmem:[%s1 + $0x28] sm:$0xff]
          %v424 = vld [vmem:[%s1 + $0x30] sm:$0xff]
          %v425 = vld [vmem:[%s1 + $0x38] sm:$0xff]
          %vm426 = vcmask 523264
          %v428 = vsel %vm426, %v417, 0
          %430 = vmatpush.msra.mxu0 0.0
          %431 = vmatpush.msra.mxu0 0.0
          %432 = vmatpush.msra.mxu0 0.0
          %433 = vmatpush.msra.mxu0 0.0
          %434 = vmatpush.msra.mxu0 0.0
          %435 = vmatpush.msra.mxu0 0.0
          %436 = vmatpush.msra.mxu0 0.0
          %437 = vmatpush.msra.mxu0 0.0
          %438 = vmatpush.msra.mxu0 %v425
          %439 = vmatpush.msra.mxu0 %v424
          %440 = vmatpush.msra.mxu0 %v423
          %441 = vmatpush.msra.mxu0 %v422
          %442 = vmatpush.msra.mxu0 %v421
          %443 = vmatpush.msra.mxu0 %v420
          %444 = vmatpush.msra.mxu0 %v419
          %445 = vmatpush.msra.mxu0 %v418
          %446 = vmatmul.f32.gmra.mxu0 %v428
          %v447 = vpop.f32.mrf.mxu0
          %v448 = vadd.f32 0.0, %v447
          %449 = vdwg.mxu0
          %v450 = vmax.f32 %v448, 0.0
          %v451 = vld [vmem:[%s2] sm:$0xf]
          %vm452 = vcmask 31744
          %v454 = vsel %vm452, %v450, 0
          %vm456 = vcmask 1043456
          %v458 = vsel %vm456, %v451, 0
          %460 = vmatpush.msra.mxu0 0.0
          %461 = vmatpush.msra.mxu0 0.0
          %462 = vmatpush.msra.mxu0 0.0
          %463 = vmatpush.msra.mxu0 0.0
          %464 = vmatpush.msra.mxu0 0.0
          %465 = vmatpush.msra.mxu0 0.0
          %466 = vmatpush.msra.mxu0 0.0
          %467 = vmatpush.msra.mxu0 0.0
          %468 = vmatpush.msra.mxu0 0.0
          %469 = vmatpush.msra.mxu0 0.0
          %470 = vmatpush.msra.mxu0 0.0
          %471 = vmatpush.msra.mxu0 0.0
          %472 = vmatpush.msra.mxu0 0.0
          %473 = vmatpush.msra.mxu0 0.0
          %474 = vmatpush.msra.mxu0 0.0
          %475 = vmatpush.msra.mxu0 %v458
          %476 = vmatmul.f32.gmra.mxu0 %v454
          %v477 = vpop.f32.mrf.mxu0
          %v478 = vadd.f32 0.0, %v477
          %479 = vdwg.mxu0
          %v481 = vrot.slane %v478, 2
          %v483 = vadd.f32 %v478, %v481
          %v484 = vxor.u32 %v483, 2147483648
          %v485 = vmul.f32 %v484, 1.442695
          %v486 = vpow.pop %v485
          %v487 = vadd.f32 %v486, 1.0
          %v488 = vrcp.pop %v487
          %v489 = vmul.f32 %v487, %v488
          %v490 = vsub.f32 1.0, %v489
          %v491 = vmul.f32 %v488, %v490
          %v492 = vadd.f32 %v488, %v491
          %vm493 = vweird.f32 %v487
          %vm494 = vweird.f32 %v488
          %vm495 = vmor %vm493, %vm494
          %v496 = vsel %vm495, %v488, %v492
          %v497 = vand.u32 2147483647, %v487
          %vm498 = vcmp.eq.f32.partialorder %v497, 8.507059e+37
          %v499 = vand.u32 %v487, 2147483648
          %v500 = vor.u32 1.1754944e-38, %v499
          %v501 = vsel %vm498, %v500, %v496
          %v502 = vmul.f32 1.0, %v501
          %503 = vst.msk [vmem:[#allocation8] sm:$0x3] %vm323, %v502
        $region44: #{tpu_custom_call.1} parent=31 // pred_fallthru
          _
        // Predicated region
        $region45: #{tpu_custom_call.1} parent=31 // pred_check
          %p504 = pneg %p118
        $region46: #{tpu_custom_call.1} parent=31 // pred_check_branch
          %506 = sbr.rel (%p504) target = $region48
        $region47: #{tpu_custom_call.1} parent=31 // pred_region
          %508 = vsyncadd [#allocation7], 0
          %s509 = smul.addr %s22, 2
          %s510 = scalar_lea.hbm %s3, %s509
          %s512 = sshll.u32 [#allocation8], 4
          %s513 = int_to_ptr.vmem [resolvable:$true] %s512
          %s514 = sshll.u32 %s510, 4
          %s515 = int_to_ptr.hbm [resolvable:$true] %s514
          %517 = dma.vmem_to_hbm [thread:$0]  %s513, 32, %s515, [#allocation7]
        $region48: #{tpu_custom_call.1} parent=31 // pred_fallthru
          _
        // Predicated region
        $region49: #{tpu_custom_call.1} parent=31 // pred_check
          %p518 = pneg %p118
        $region50: #{tpu_custom_call.1} parent=31 // pred_check_branch
          %520 = sbr.rel (%p518) target = $region52
        $region51: #{tpu_custom_call.1} parent=31 // pred_region
          %522 = dma.done [#allocation7], 32
        $region52: #{tpu_custom_call.1} parent=31 // pred_fallthru
          _
      $region32: #{tpu_custom_call.1} parent=5 // pred_fallthru
        _
      %p523 = scmp.le.s32.totalorder 2, %s13
      // Predicated region
      $region53: #{tpu_custom_call.1} parent=5 // pred_check
        %p524 = pneg %p523
      $region54: #{tpu_custom_call.1} parent=5 // pred_check_branch
        %526 = sbr.rel (%p524) target = $region56
      $region55: #{tpu_custom_call.1} parent=5 // pred_region
        %s527 = ssub.s32 %s13, 2
      $region56: #{tpu_custom_call.1} parent=5 // pred_fallthru
        _
    $region6: #{tpu_custom_call.1} parent=1 // loop_footer
      %s17 = sadd.s32 1, %s13
    $region7: #{tpu_custom_call.1} parent=1 // loop_footer_branch
      %12 = sbr.rel target = $region3
    $region8: #{tpu_custom_call.1} parent=1 // loop_exit
      _
    %528 = vsyncpa [#allocation6], 1
    %s529 = scalar_lea.sflag [#allocation6], 1
    %530 = vsyncpa %s529, 1
    %531 = vsyncpa [#allocation7], 1
    %s532 = scalar_lea.sflag [#allocation7], 1
    %533 = vsyncpa %s532, 1

</llo_original>
